<compile_context>
chip_gen: v7x
topology: tpu7x:2x2x1
jax: 0.10.0
libtpu: 0.0.40
codegen_flags: <defaults>
</compile_context>

<pallas_src>
import jax
import jax.numpy as jnp
from jax.experimental import pallas as pl
from jax.experimental.pallas import tpu as pltpu


def _make_resblock_kernel(H, W, C):
    HW = H * W

    def kernel(x_ref, w1_ref, b1_ref, w2_ref, b2_ref, out_ref):
        """x_ref/out_ref: (1, C, HW); w*_ref: (C, 9*C); b*_ref: (C, 1). All f32."""
        x = x_ref[0]            # (C, HW) -- channel planes, pixels on lanes
        w1 = w1_ref[...]        # (Cout, 9*Cin)
        w2 = w2_ref[...]
        b1 = b1_ref[...]        # (C, 1) -> broadcasts along lanes
        b2 = b2_ref[...]

        # Pixel-column index of every lane; used to kill the horizontal wrap-around
        # contributions of the dx = -1 / +1 taps at the W borders.
        col = jax.lax.broadcasted_iota(jnp.int32, (1, HW), 1) % W
        not_first_col = col != 0          # dx = -1 invalid where w == 0
        not_last_col = col != (W - 1)     # dx = +1 invalid where w == W - 1

        zpad = jnp.zeros((C, W + 1), jnp.float32)   # halo pad, hoisted & shared

        def conv3x3(inp, w):
            """inp: (C, HW) -> (C, HW), zero-padded 3x3 conv as a single matmul."""
            # W+1 zero lanes on each side absorb the vertical halo exactly and the
            # +/-1-lane overrun of the corner taps; only the horizontal wrap within a
            # row needs masking (2 of the 9 taps).
            p = jnp.concatenate([zpad, inp, zpad], axis=1)        # (C, HW + 2W + 2)
            taps = []
            for ky in range(3):
                for kx in range(3):
                    d = (ky - 1) * W + (kx - 1)
                    s = p[:, (W + 1) + d:(W + 1) + d + HW]        # (C, HW) static lane slice
                    if kx == 0:
                        s = jnp.where(not_first_col, s, 0.0)
                    elif kx == 2:
                        s = jnp.where(not_last_col, s, 0.0)
                    taps.append(s)
            patch = jnp.concatenate(taps, axis=0)                 # (9*C, HW) im2col
            # One MXU matmul per conv; default precision (single bf16 pass), f32 acc.
            return jnp.dot(w, patch, preferred_element_type=jnp.float32)   # (Cout, HW)

        hidden = jnp.maximum(conv3x3(x, w1) + b1, 0.0)            # conv1 -> ReLU
        y = conv3x3(hidden, w2) + b2 + x                          # conv2 -> + residual
        out_ref[0] = jnp.maximum(y, 0.0).astype(out_ref.dtype)    # ReLU, lane-dense store

    return kernel


def resblock_forward(x_nchw, w1, b1, w2, b2):
    """x_nchw: (N, C, H, W); w*: (C, C, 3, 3); b*: (C,).  Returns NCHW f32."""
    N, C, H, W = x_nchw.shape
    assert w1.shape == (C, C, 3, 3) and w2.shape == (C, C, 3, 3)  # residual needs Cin==Cout
    HW = H * W

    # NCHW -> (N, C, H*W) is a pure reshape of contiguous data: no transpose, no copy.
    x_flat = x_nchw.reshape(N, C, HW).astype(jnp.float32)

    def prep_w(w):
        # (Cout, Cin, kh, kw) -> (Cout, 9*Cin), column index = (ky*3 + kx)*Cin + ci,
        # matching the im2col patch row order built inside the kernel.
        return jnp.transpose(w, (0, 2, 3, 1)).reshape(C, 9 * C).astype(jnp.float32)

    w1f, w2f = prep_w(w1), prep_w(w2)
    b1c = b1.reshape(C, 1).astype(jnp.float32)
    b2c = b2.reshape(C, 1).astype(jnp.float32)

    flops = 2 * (2 * 9 * N * HW * C * C)                      # two 3x3 convs
    bytes_accessed = 4 * (2 * N * C * HW + 2 * (9 * C * C + C))

    out_flat = pl.pallas_call(
        _make_resblock_kernel(H, W, C),
        out_shape=jax.ShapeDtypeStruct((N, C, HW), jnp.float32),
        grid=(N,),
        in_specs=[
            pl.BlockSpec((1, C, HW), lambda n: (n, 0, 0)),
            pl.BlockSpec((C, 9 * C), lambda n: (0, 0)),
            pl.BlockSpec((C, 1), lambda n: (0, 0)),
            pl.BlockSpec((C, 9 * C), lambda n: (0, 0)),
            pl.BlockSpec((C, 1), lambda n: (0, 0)),
        ],
        out_specs=pl.BlockSpec((1, C, HW), lambda n: (n, 0, 0)),
        compiler_params=pltpu.CompilerParams(
            dimension_semantics=("parallel",)),
        cost_estimate=pl.CostEstimate(
            flops=flops, transcendentals=0, bytes_accessed=bytes_accessed),
    )(x_flat, w1f, b1c, w2f, b2c)

    return out_flat.reshape(N, C, H, W)


def resblock_reference(x, w1, b1, w2, b2):
    """Pure-JAX NCHW reference matching the PyTorch module (full-f32 ground truth)."""
    dn = jax.lax.conv_dimension_numbers(x.shape, w1.shape, ("NCHW", "OIHW", "NCHW"))
    y = jax.lax.conv_general_dilated(x, w1, (1, 1), ((1, 1), (1, 1)),
                                     dimension_numbers=dn,
                                     precision=jax.lax.Precision.HIGHEST)
    y = jnp.maximum(y + b1.reshape(1, -1, 1, 1), 0.0)
    z = jax.lax.conv_general_dilated(y, w2, (1, 1), ((1, 1), (1, 1)),
                                     dimension_numbers=dn,
                                     precision=jax.lax.Precision.HIGHEST)
    z = z + b2.reshape(1, -1, 1, 1)
    return jnp.maximum(z + x, 0.0)


if __name__ == "__main__":
    key = jax.random.PRNGKey(0)
    kx, k1, kb1, k2, kb2 = jax.random.split(key, 5)

    # Residual add in the module requires in_channel == out_channel.
    N, C, H, W = 2, 4, 16, 16
    x = jax.random.normal(kx, (N, C, H, W), jnp.float32)
    w1 = jax.random.normal(k1, (C, C, 3, 3), jnp.float32) * 0.1
    b1 = jax.random.normal(kb1, (C,), jnp.float32) * 0.1
    w2 = jax.random.normal(k2, (C, C, 3, 3), jnp.float32) * 0.1
    b2 = jax.random.normal(kb2, (C,), jnp.float32) * 0.1

    out = resblock_forward(x, w1, b1, w2, b2)
    out = jax.block_until_ready(out)

    ref = resblock_reference(x, w1, b1, w2, b2)
    assert out.shape == (N, C, H, W)
    # The kernel runs its taps as single-pass bf16 MXU matmuls (default precision) with
    # f32 accumulation; compare against the full-f32 reference with a matching tolerance.
    max_err = float(jnp.max(jnp.abs(out - ref)))
    assert jnp.allclose(out, ref, rtol=2e-2, atol=2e-2), max_err
    print("KERNEL_OK")
</pallas_src>

<mosaic_0001>
module attributes {stable_mosaic.version = 11 : i64} {
  func.func @kernel(%arg0: i32, %arg1: memref<1x4x256xf32, #tpu.memory_space<vmem>>, %arg2: memref<4x36xf32, #tpu.memory_space<vmem>>, %arg3: memref<4x1xf32, #tpu.memory_space<vmem>>, %arg4: memref<4x36xf32, #tpu.memory_space<vmem>>, %arg5: memref<4x1xf32, #tpu.memory_space<vmem>>, %arg6: memref<1x4x256xf32, #tpu.memory_space<vmem>>) attributes {dimension_semantics = [#tpu.dimension_semantics<parallel>], iteration_bounds = array<i64: 2>, scalar_prefetch = 0 : i64, scratch_operands = 0 : i64, tpu.core_type = #tpu.core_type<tc>, window_params = [{transform_indices = @transform_0, window_bounds = array<i64: 1, 4, 256>}, {pipeline_mode = #tpu.pipeline_mode<synchronous>, transform_indices = @transform_1, window_bounds = array<i64: 4, 36>}, {pipeline_mode = #tpu.pipeline_mode<synchronous>, transform_indices = @transform_2, window_bounds = array<i64: 4, 1>}, {pipeline_mode = #tpu.pipeline_mode<synchronous>, transform_indices = @transform_3, window_bounds = array<i64: 4, 36>}, {pipeline_mode = #tpu.pipeline_mode<synchronous>, transform_indices = @transform_4, window_bounds = array<i64: 4, 1>}, {transform_indices = @transform_5, window_bounds = array<i64: 1, 4, 256>}]} {
    %c0 = arith.constant 0 : index
    %c0_0 = arith.constant 0 : index
    %c0_1 = arith.constant 0 : index
    %0 = vector.load %arg1[%c0, %c0_0, %c0_1] : memref<1x4x256xf32, #tpu.memory_space<vmem>>, vector<1x4x256xf32>
    %1 = vector.shape_cast %0 : vector<1x4x256xf32> to vector<4x256xf32>
    %c0_2 = arith.constant 0 : index
    %c0_3 = arith.constant 0 : index
    %2 = vector.load %arg2[%c0_2, %c0_3] : memref<4x36xf32, #tpu.memory_space<vmem>>, vector<4x36xf32>
    %c0_4 = arith.constant 0 : index
    %c0_5 = arith.constant 0 : index
    %3 = vector.load %arg4[%c0_4, %c0_5] : memref<4x36xf32, #tpu.memory_space<vmem>>, vector<4x36xf32>
    %c0_6 = arith.constant 0 : index
    %c0_7 = arith.constant 0 : index
    %4 = vector.load %arg3[%c0_6, %c0_7] : memref<4x1xf32, #tpu.memory_space<vmem>>, vector<4x1xf32>
    %c0_8 = arith.constant 0 : index
    %c0_9 = arith.constant 0 : index
    %5 = vector.load %arg5[%c0_8, %c0_9] : memref<4x1xf32, #tpu.memory_space<vmem>>, vector<4x1xf32>
    %6 = tpu.iota {dimensions = array<i32: 1>} : vector<1x256xi32>
    %c16_i32 = arith.constant 16 : i32
    %c0_i32 = arith.constant 0 : i32
    %7 = arith.cmpi eq, %c16_i32, %c0_i32 : i32
    %c1_i32 = arith.constant 1 : i32
    %8 = arith.select %7, %c1_i32, %c16_i32 : i32
    %9 = vector.broadcast %8 : i32 to vector<1x256xi32>
    %10 = arith.remsi %6, %9 : vector<1x256xi32>
    %c0_i32_10 = arith.constant 0 : i32
    %11 = vector.broadcast %c0_i32_10 : i32 to vector<1x256xi32>
    %12 = arith.cmpi ne, %10, %11 : vector<1x256xi32>
    %c0_i32_11 = arith.constant 0 : i32
    %13 = vector.broadcast %c0_i32_11 : i32 to vector<1x256xi32>
    %14 = arith.cmpi slt, %10, %13 : vector<1x256xi32>
    %c0_i32_12 = arith.constant 0 : i32
    %15 = arith.cmpi slt, %8, %c0_i32_12 : i32
    %16 = vector.broadcast %15 : i1 to vector<1x256xi1>
    %17 = vector.broadcast %16 : vector<1x256xi1> to vector<1x256xi1>
    %18 = arith.xori %14, %17 : vector<1x256xi1>
    %19 = arith.andi %18, %12 : vector<1x256xi1>
    %20 = vector.broadcast %8 : i32 to vector<1x256xi32>
    %21 = arith.addi %10, %20 : vector<1x256xi32>
    %22 = arith.select %19, %21, %10 : vector<1x256xi1>, vector<1x256xi32>
    %c0_i32_13 = arith.constant 0 : i32
    %23 = vector.broadcast %c0_i32_13 : i32 to vector<1x256xi32>
    %24 = arith.cmpi ne, %22, %23 : vector<1x256xi32>
    %c15_i32 = arith.constant 15 : i32
    %25 = vector.broadcast %c15_i32 : i32 to vector<1x256xi32>
    %26 = arith.cmpi ne, %22, %25 : vector<1x256xi32>
    %cst = arith.constant 0.000000e+00 : f32
    %27 = vector.broadcast %cst : f32 to vector<4x17xf32>
    %28 = tpu.concatenate %27, %1, %27 in 1 : vector<4x17xf32>, vector<4x256xf32>, vector<4x17xf32> -> vector<4x290xf32>
    %29 = vector.extract_strided_slice %28 {offsets = [0, 0], sizes = [4, 256], strides = [1, 1]} : vector<4x290xf32> to vector<4x256xf32>
    %cst_14 = arith.constant 0.000000e+00 : f32
    %30 = vector.shape_cast %24 : vector<1x256xi1> to vector<1x256xi1>
    %31 = vector.broadcast %30 : vector<1x256xi1> to vector<4x256xi1>
    %32 = vector.broadcast %cst_14 : f32 to vector<4x256xf32>
    %33 = arith.select %31, %29, %32 : vector<4x256xi1>, vector<4x256xf32>
    %34 = vector.extract_strided_slice %28 {offsets = [0, 1], sizes = [4, 256], strides = [1, 1]} : vector<4x290xf32> to vector<4x256xf32>
    %35 = vector.extract_strided_slice %28 {offsets = [0, 2], sizes = [4, 256], strides = [1, 1]} : vector<4x290xf32> to vector<4x256xf32>
    %cst_15 = arith.constant 0.000000e+00 : f32
    %36 = vector.shape_cast %26 : vector<1x256xi1> to vector<1x256xi1>
    %37 = vector.broadcast %36 : vector<1x256xi1> to vector<4x256xi1>
    %38 = vector.broadcast %cst_15 : f32 to vector<4x256xf32>
    %39 = arith.select %37, %35, %38 : vector<4x256xi1>, vector<4x256xf32>
    %40 = vector.extract_strided_slice %28 {offsets = [0, 16], sizes = [4, 256], strides = [1, 1]} : vector<4x290xf32> to vector<4x256xf32>
    %cst_16 = arith.constant 0.000000e+00 : f32
    %41 = vector.shape_cast %24 : vector<1x256xi1> to vector<1x256xi1>
    %42 = vector.broadcast %41 : vector<1x256xi1> to vector<4x256xi1>
    %43 = vector.broadcast %cst_16 : f32 to vector<4x256xf32>
    %44 = arith.select %42, %40, %43 : vector<4x256xi1>, vector<4x256xf32>
    %45 = vector.extract_strided_slice %28 {offsets = [0, 17], sizes = [4, 256], strides = [1, 1]} : vector<4x290xf32> to vector<4x256xf32>
    %46 = vector.extract_strided_slice %28 {offsets = [0, 18], sizes = [4, 256], strides = [1, 1]} : vector<4x290xf32> to vector<4x256xf32>
    %cst_17 = arith.constant 0.000000e+00 : f32
    %47 = vector.shape_cast %26 : vector<1x256xi1> to vector<1x256xi1>
    %48 = vector.broadcast %47 : vector<1x256xi1> to vector<4x256xi1>
    %49 = vector.broadcast %cst_17 : f32 to vector<4x256xf32>
    %50 = arith.select %48, %46, %49 : vector<4x256xi1>, vector<4x256xf32>
    %51 = vector.extract_strided_slice %28 {offsets = [0, 32], sizes = [4, 256], strides = [1, 1]} : vector<4x290xf32> to vector<4x256xf32>
    %cst_18 = arith.constant 0.000000e+00 : f32
    %52 = vector.shape_cast %24 : vector<1x256xi1> to vector<1x256xi1>
    %53 = vector.broadcast %52 : vector<1x256xi1> to vector<4x256xi1>
    %54 = vector.broadcast %cst_18 : f32 to vector<4x256xf32>
    %55 = arith.select %53, %51, %54 : vector<4x256xi1>, vector<4x256xf32>
    %56 = vector.extract_strided_slice %28 {offsets = [0, 33], sizes = [4, 256], strides = [1, 1]} : vector<4x290xf32> to vector<4x256xf32>
    %57 = vector.extract_strided_slice %28 {offsets = [0, 34], sizes = [4, 256], strides = [1, 1]} : vector<4x290xf32> to vector<4x256xf32>
    %cst_19 = arith.constant 0.000000e+00 : f32
    %58 = vector.shape_cast %26 : vector<1x256xi1> to vector<1x256xi1>
    %59 = vector.broadcast %58 : vector<1x256xi1> to vector<4x256xi1>
    %60 = vector.broadcast %cst_19 : f32 to vector<4x256xf32>
    %61 = arith.select %59, %57, %60 : vector<4x256xi1>, vector<4x256xf32>
    %62 = tpu.concatenate %33, %34, %39, %44, %45, %50, %55, %56, %61 in 0 : vector<4x256xf32>, vector<4x256xf32>, vector<4x256xf32>, vector<4x256xf32>, vector<4x256xf32>, vector<4x256xf32>, vector<4x256xf32>, vector<4x256xf32>, vector<4x256xf32> -> vector<36x256xf32>
    %cst_20 = arith.constant dense<0.000000e+00> : vector<4x256xf32>
    %63 = tpu.matmul %2, %62, %cst_20 {dimension_numbers = #tpu.dot_dimension_numbers<[1], [0], [0], [1], [0, 0, 1, 1], [], []>} : vector<4x36xf32>, vector<36x256xf32>, vector<4x256xf32> -> vector<4x256xf32>
    %64 = vector.broadcast %4 : vector<4x1xf32> to vector<4x256xf32>
    %65 = arith.addf %63, %64 : vector<4x256xf32>
    %cst_21 = arith.constant 0.000000e+00 : f32
    %66 = vector.broadcast %cst_21 : f32 to vector<4x256xf32>
    %67 = arith.maximumf %65, %66 : vector<4x256xf32>
    %68 = tpu.concatenate %27, %67, %27 in 1 : vector<4x17xf32>, vector<4x256xf32>, vector<4x17xf32> -> vector<4x290xf32>
    %69 = vector.extract_strided_slice %68 {offsets = [0, 0], sizes = [4, 256], strides = [1, 1]} : vector<4x290xf32> to vector<4x256xf32>
    %cst_22 = arith.constant 0.000000e+00 : f32
    %70 = vector.shape_cast %24 : vector<1x256xi1> to vector<1x256xi1>
    %71 = vector.broadcast %70 : vector<1x256xi1> to vector<4x256xi1>
    %72 = vector.broadcast %cst_22 : f32 to vector<4x256xf32>
    %73 = arith.select %71, %69, %72 : vector<4x256xi1>, vector<4x256xf32>
    %74 = vector.extract_strided_slice %68 {offsets = [0, 1], sizes = [4, 256], strides = [1, 1]} : vector<4x290xf32> to vector<4x256xf32>
    %75 = vector.extract_strided_slice %68 {offsets = [0, 2], sizes = [4, 256], strides = [1, 1]} : vector<4x290xf32> to vector<4x256xf32>
    %cst_23 = arith.constant 0.000000e+00 : f32
    %76 = vector.shape_cast %26 : vector<1x256xi1> to vector<1x256xi1>
    %77 = vector.broadcast %76 : vector<1x256xi1> to vector<4x256xi1>
    %78 = vector.broadcast %cst_23 : f32 to vector<4x256xf32>
    %79 = arith.select %77, %75, %78 : vector<4x256xi1>, vector<4x256xf32>
    %80 = vector.extract_strided_slice %68 {offsets = [0, 16], sizes = [4, 256], strides = [1, 1]} : vector<4x290xf32> to vector<4x256xf32>
    %cst_24 = arith.constant 0.000000e+00 : f32
    %81 = vector.shape_cast %24 : vector<1x256xi1> to vector<1x256xi1>
    %82 = vector.broadcast %81 : vector<1x256xi1> to vector<4x256xi1>
    %83 = vector.broadcast %cst_24 : f32 to vector<4x256xf32>
    %84 = arith.select %82, %80, %83 : vector<4x256xi1>, vector<4x256xf32>
    %85 = vector.extract_strided_slice %68 {offsets = [0, 17], sizes = [4, 256], strides = [1, 1]} : vector<4x290xf32> to vector<4x256xf32>
    %86 = vector.extract_strided_slice %68 {offsets = [0, 18], sizes = [4, 256], strides = [1, 1]} : vector<4x290xf32> to vector<4x256xf32>
    %cst_25 = arith.constant 0.000000e+00 : f32
    %87 = vector.shape_cast %26 : vector<1x256xi1> to vector<1x256xi1>
    %88 = vector.broadcast %87 : vector<1x256xi1> to vector<4x256xi1>
    %89 = vector.broadcast %cst_25 : f32 to vector<4x256xf32>
    %90 = arith.select %88, %86, %89 : vector<4x256xi1>, vector<4x256xf32>
    %91 = vector.extract_strided_slice %68 {offsets = [0, 32], sizes = [4, 256], strides = [1, 1]} : vector<4x290xf32> to vector<4x256xf32>
    %cst_26 = arith.constant 0.000000e+00 : f32
    %92 = vector.shape_cast %24 : vector<1x256xi1> to vector<1x256xi1>
    %93 = vector.broadcast %92 : vector<1x256xi1> to vector<4x256xi1>
    %94 = vector.broadcast %cst_26 : f32 to vector<4x256xf32>
    %95 = arith.select %93, %91, %94 : vector<4x256xi1>, vector<4x256xf32>
    %96 = vector.extract_strided_slice %68 {offsets = [0, 33], sizes = [4, 256], strides = [1, 1]} : vector<4x290xf32> to vector<4x256xf32>
    %97 = vector.extract_strided_slice %68 {offsets = [0, 34], sizes = [4, 256], strides = [1, 1]} : vector<4x290xf32> to vector<4x256xf32>
    %cst_27 = arith.constant 0.000000e+00 : f32
    %98 = vector.shape_cast %26 : vector<1x256xi1> to vector<1x256xi1>
    %99 = vector.broadcast %98 : vector<1x256xi1> to vector<4x256xi1>
    %100 = vector.broadcast %cst_27 : f32 to vector<4x256xf32>
    %101 = arith.select %99, %97, %100 : vector<4x256xi1>, vector<4x256xf32>
    %102 = tpu.concatenate %73, %74, %79, %84, %85, %90, %95, %96, %101 in 0 : vector<4x256xf32>, vector<4x256xf32>, vector<4x256xf32>, vector<4x256xf32>, vector<4x256xf32>, vector<4x256xf32>, vector<4x256xf32>, vector<4x256xf32>, vector<4x256xf32> -> vector<36x256xf32>
    %cst_28 = arith.constant dense<0.000000e+00> : vector<4x256xf32>
    %103 = tpu.matmul %3, %102, %cst_28 {dimension_numbers = #tpu.dot_dimension_numbers<[1], [0], [0], [1], [0, 0, 1, 1], [], []>} : vector<4x36xf32>, vector<36x256xf32>, vector<4x256xf32> -> vector<4x256xf32>
    %104 = vector.broadcast %5 : vector<4x1xf32> to vector<4x256xf32>
    %105 = arith.addf %103, %104 : vector<4x256xf32>
    %106 = arith.addf %105, %1 : vector<4x256xf32>
    %cst_29 = arith.constant 0.000000e+00 : f32
    %107 = vector.broadcast %cst_29 : f32 to vector<4x256xf32>
    %108 = arith.maximumf %106, %107 : vector<4x256xf32>
    %c0_30 = arith.constant 0 : index
    %c0_31 = arith.constant 0 : index
    %c0_32 = arith.constant 0 : index
    %109 = vector.load %arg6[%c0_30, %c0_31, %c0_32] : memref<1x4x256xf32, #tpu.memory_space<vmem>>, vector<1x4x256xf32>
    %110 = vector.shape_cast %109 : vector<1x4x256xf32> to vector<4x256xf32>
    %111 = vector.shape_cast %108 : vector<4x256xf32> to vector<1x4x256xf32>
    tpu.vector_store %arg6[%c0_30, %c0_31, %c0_32], %111 {strides = array<i32>} : memref<1x4x256xf32, #tpu.memory_space<vmem>>, vector<1x4x256xf32>,
    return
  }
  func.func @transform_0(%arg0: i32) -> (i32, i32, i32) {
    %c0_i32 = arith.constant 0 : i32
    %c0_i32_0 = arith.constant 0 : i32
    %c0_i32_1 = arith.constant 0 : i32
    return %arg0, %c0_i32, %c0_i32_0 : i32, i32, i32
  }
  func.func @transform_1(%arg0: i32) -> (i32, i32) {
    %c0_i32 = arith.constant 0 : i32
    %c0_i32_0 = arith.constant 0 : i32
    %c0_i32_1 = arith.constant 0 : i32
    return %c0_i32, %c0_i32_0 : i32, i32
  }
  func.func @transform_2(%arg0: i32) -> (i32, i32) {
    %c0_i32 = arith.constant 0 : i32
    %c0_i32_0 = arith.constant 0 : i32
    %c0_i32_1 = arith.constant 0 : i32
    return %c0_i32, %c0_i32_0 : i32, i32
  }
  func.func @transform_3(%arg0: i32) -> (i32, i32) {
    %c0_i32 = arith.constant 0 : i32
    %c0_i32_0 = arith.constant 0 : i32
    %c0_i32_1 = arith.constant 0 : i32
    return %c0_i32, %c0_i32_0 : i32, i32
  }
  func.func @transform_4(%arg0: i32) -> (i32, i32) {
    %c0_i32 = arith.constant 0 : i32
    %c0_i32_0 = arith.constant 0 : i32
    %c0_i32_1 = arith.constant 0 : i32
    return %c0_i32, %c0_i32_0 : i32, i32
  }
  func.func @transform_5(%arg0: i32) -> (i32, i32, i32) {
    %c0_i32 = arith.constant 0 : i32
    %c0_i32_0 = arith.constant 0 : i32
    %c0_i32_1 = arith.constant 0 : i32
    return %arg0, %c0_i32, %c0_i32_0 : i32, i32, i32
  }
}

</mosaic_0001>

<llo_original>
// kernel: tpu_custom_call.1
$region0: #{tpu_custom_call.1}
  #allocation0 [shape = 'u32[]', space=smem, size = 0x4, offset = 0x4, fixed_abs, tag = 'smem constant byte address 0x4 - core index']
  #allocation1 [shape = 'u32[144,128]{1,0:T(1,128)}', space=vmem, size = 0x12000, scoped, tag = 'internal scratch']
  %s0 = inlined_call_operand.hbm [shape: f32[2,4,256], index: 0, kind: input, shape index: {}]
  %s1 = inlined_call_operand.vmem [shape: f32[4,36], index: 1, kind: input, shape index: {}]
  %s2 = inlined_call_operand.vmem [shape: f32[4,1], index: 2, kind: input, shape index: {}]
  %s3 = inlined_call_operand.vmem [shape: f32[4,36], index: 3, kind: input, shape index: {}]
  %s4 = inlined_call_operand.vmem [shape: f32[4,1], index: 4, kind: input, shape index: {}]
  %s5 = inlined_call_operand.hbm [shape: f32[2,4,256], index: 5, kind: output, shape index: {}]
  %s6 = sld [smem:[#allocation0]]
  $region57: #{tpu_custom_call.1} parent=0
    _
  %s8 = ssub.s32 1, %s6
  %s9 = scalar_select 0, %s8, %s6
  $region1: #{tpu_custom_call.1} parent=0
    #allocation2 [shape = 'u8[8192]{0}', space=vmem, size = 0x2000, scoped, tag = 'input window, operand 0']
    #allocation3 [shape = 's32[2]{0}', space=sflag, size = 0x8, scoped, tag = 'scoped memory for tpu_custom_call.1']
    #allocation4 [shape = 's32[2]{0}', space=sflag, size = 0x8, scoped, tag = 'scoped memory for tpu_custom_call.1']
    #allocation5 [shape = 'u8[8192]{0}', space=vmem, size = 0x2000, scoped, tag = 'output window, operand 0']
    %10 = vsyncpa [#allocation3], 0
    %s11 = scalar_lea.sflag [#allocation3], 1
    %12 = vsyncpa %s11, 0
    %13 = vsyncpa [#allocation4], 0
    %s14 = scalar_lea.sflag [#allocation4], 1
    %15 = vsyncpa %s14, 0
    loop: start=0, step=1, limit=4
    $region2: #{tpu_custom_call.1} parent=1 // loop_pre_header
      _
    $region3: #{tpu_custom_call.1} parent=1 // loop_header
      %s17 = sphi 0, %s21
      %p18 = scmp.ge.s32.totalorder %s17, 4
      %s27 = sphi 0, %s29
      %s30 = sphi 0, %s27
      %s31 = sphi 0, %s30
      %s47 = sphi 0, %s31
      %s51 = sphi 0, %s51
      %s53 = sphi 0, %s51
      %s54 = sphi 0, %s53
      %s68 = sphi 0, %s54
      %s72 = sphi 0, %s72
      %s74 = sphi 0, %s72
      %s75 = sphi 0, %s74
      %s89 = sphi 0, %s75
      %s93 = sphi 0, %s93
      %s95 = sphi 0, %s93
      %s96 = sphi 0, %s95
      %s110 = sphi 0, %s96
      %s114 = sphi 0, %s114
      %s116 = sphi 0, %s114
      %s117 = sphi 0, %s116
      %s131 = sphi 0, %s117
      %s137 = sphi 0, %s139
      %s140 = sphi 0, %s137
      %s141 = sphi 0, %s140
      %s157 = sphi 0, %s141
    $region4: #{tpu_custom_call.1} parent=1 // loop_header_branch
      %20 = sbr.rel (%p18) target = $region8
    $region5: #{tpu_custom_call.1} parent=1 // loop_body
      %s22 = ssub.s32 %s17, 1
      %s23 = ssub.s32 %s17, 2
      %s24 = sadd.s32 %s17, 1
      %s25 = ssub.s32 %s17, %s24
      %p26 = scmp.eq.s32.totalorder %s25, 0
      %s28 = sadd.s32 %s27, 1
      %s29 = scalar_select %p26, %s27, %s28
      %p32 = pneg %p26
      %p33 = scmp.eq.s32.totalorder %s17, 1
      %p34 = por %p32, %p33
      %p35 = scmp.ne.s32.totalorder %s27, %s30
      %p36 = scmp.eq.s32.totalorder %s17, 0
      %p37 = por %p35, %p36
      %p38 = scmp.ne.s32.totalorder %s27, %s30
      %p39 = scmp.eq.s32.totalorder %s22, 1
      %p40 = por %p38, %p39
      %p41 = scmp.ne.s32.totalorder %s30, %s31
      %p42 = scmp.eq.s32.totalorder %s22, 0
      %p43 = por %p41, %p42
      %p44 = scmp.ne.s32.totalorder %s30, %s31
      %p45 = scmp.eq.s32.totalorder %s23, 1
      %p46 = por %p44, %p45
      %p48 = scmp.ne.s32.totalorder %s31, %s47
      %p49 = scmp.eq.s32.totalorder %s23, 0
      %p50 = por %p48, %p49
      %s52 = sadd.s32 %s51, 1
      %p55 = scmp.eq.s32.totalorder %s17, 1
      %p56 = scmp.ne.s32.totalorder %s51, %s53
      %p57 = scmp.eq.s32.totalorder %s17, 0
      %p58 = por %p56, %p57
      %p59 = scmp.ne.s32.totalorder %s51, %s53
      %p60 = scmp.eq.s32.totalorder %s22, 1
      %p61 = por %p59, %p60
      %p62 = scmp.ne.s32.totalorder %s53, %s54
      %p63 = scmp.eq.s32.totalorder %s22, 0
      %p64 = por %p62, %p63
      %p65 = scmp.ne.s32.totalorder %s53, %s54
      %p66 = scmp.eq.s32.totalorder %s23, 1
      %p67 = por %p65, %p66
      %p69 = scmp.ne.s32.totalorder %s54, %s68
      %p70 = scmp.eq.s32.totalorder %s23, 0
      %p71 = por %p69, %p70
      %s73 = sadd.s32 %s72, 1
      %p76 = scmp.eq.s32.totalorder %s17, 1
      %p77 = scmp.ne.s32.totalorder %s72, %s74
      %p78 = scmp.eq.s32.totalorder %s17, 0
      %p79 = por %p77, %p78
      %p80 = scmp.ne.s32.totalorder %s72, %s74
      %p81 = scmp.eq.s32.totalorder %s22, 1
      %p82 = por %p80, %p81
      %p83 = scmp.ne.s32.totalorder %s74, %s75
      %p84 = scmp.eq.s32.totalorder %s22, 0
      %p85 = por %p83, %p84
      %p86 = scmp.ne.s32.totalorder %s74, %s75
      %p87 = scmp.eq.s32.totalorder %s23, 1
      %p88 = por %p86, %p87
      %p90 = scmp.ne.s32.totalorder %s75, %s89
      %p91 = scmp.eq.s32.totalorder %s23, 0
      %p92 = por %p90, %p91
      %s94 = sadd.s32 %s93, 1
      %p97 = scmp.eq.s32.totalorder %s17, 1
      %p98 = scmp.ne.s32.totalorder %s93, %s95
      %p99 = scmp.eq.s32.totalorder %s17, 0
      %p100 = por %p98, %p99
      %p101 = scmp.ne.s32.totalorder %s93, %s95
      %p102 = scmp.eq.s32.totalorder %s22, 1
      %p103 = por %p101, %p102
      %p104 = scmp.ne.s32.totalorder %s95, %s96
      %p105 = scmp.eq.s32.totalorder %s22, 0
      %p106 = por %p104, %p105
      %p107 = scmp.ne.s32.totalorder %s95, %s96
      %p108 = scmp.eq.s32.totalorder %s23, 1
      %p109 = por %p107, %p108
      %p111 = scmp.ne.s32.totalorder %s96, %s110
      %p112 = scmp.eq.s32.totalorder %s23, 0
      %p113 = por %p111, %p112
      %s115 = sadd.s32 %s114, 1
      %p118 = scmp.eq.s32.totalorder %s17, 1
      %p119 = scmp.ne.s32.totalorder %s114, %s116
      %p120 = scmp.eq.s32.totalorder %s17, 0
      %p121 = por %p119, %p120
      %p122 = scmp.ne.s32.totalorder %s114, %s116
      %p123 = scmp.eq.s32.totalorder %s22, 1
      %p124 = por %p122, %p123
      %p125 = scmp.ne.s32.totalorder %s116, %s117
      %p126 = scmp.eq.s32.totalorder %s22, 0
      %p127 = por %p125, %p126
      %p128 = scmp.ne.s32.totalorder %s116, %s117
      %p129 = scmp.eq.s32.totalorder %s23, 1
      %p130 = por %p128, %p129
      %p132 = scmp.ne.s32.totalorder %s117, %s131
      %p133 = scmp.eq.s32.totalorder %s23, 0
      %p134 = por %p132, %p133
      %s135 = ssub.s32 %s17, %s24
      %p136 = scmp.eq.s32.totalorder %s135, 0
      %s138 = sadd.s32 %s137, 1
      %s139 = scalar_select %p136, %s137, %s138
      %p142 = pneg %p136
      %p143 = scmp.eq.s32.totalorder %s17, 1
      %p144 = por %p142, %p143
      %p145 = scmp.ne.s32.totalorder %s137, %s140
      %p146 = scmp.eq.s32.totalorder %s17, 0
      %p147 = por %p145, %p146
      %p148 = scmp.ne.s32.totalorder %s137, %s140
      %p149 = scmp.eq.s32.totalorder %s22, 1
      %p150 = por %p148, %p149
      %p151 = scmp.ne.s32.totalorder %s140, %s141
      %p152 = scmp.eq.s32.totalorder %s22, 0
      %p153 = por %p151, %p152
      %p154 = scmp.ne.s32.totalorder %s140, %s141
      %p155 = scmp.eq.s32.totalorder %s23, 1
      %p156 = por %p154, %p155
      %p158 = scmp.ne.s32.totalorder %s141, %s157
      %p159 = scmp.eq.s32.totalorder %s23, 0
      %p160 = por %p158, %p159
      %p161 = scmp.le.s32.totalorder 1, %s17
      %p162 = scmp.lt.s32.totalorder %s17, 3
      %p163 = pnand %p161, %p162
      %p164 = pneg %p163
      // Predicated region
      $region9: #{tpu_custom_call.1} parent=5 // pred_check
        _
      $region10: #{tpu_custom_call.1} parent=5 // pred_check_branch
        %166 = sbr.rel (%p163) target = $region12
      $region11: #{tpu_custom_call.1} parent=5 // pred_region
        %s167 = ssub.s32 %s17, 1
        // Predicated region
        $region13: #{tpu_custom_call.1} parent=11 // pred_check
          %p168 = pneg %p64
        $region14: #{tpu_custom_call.1} parent=11 // pred_check_branch
          %170 = sbr.rel (%p168) target = $region16
        $region15: #{tpu_custom_call.1} parent=11 // pred_region
          _
        $region16: #{tpu_custom_call.1} parent=11 // pred_fallthru
          _
        // Predicated region
        $region17: #{tpu_custom_call.1} parent=11 // pred_check
          %p171 = pneg %p85
        $region18: #{tpu_custom_call.1} parent=11 // pred_check_branch
          %173 = sbr.rel (%p171) target = $region20
        $region19: #{tpu_custom_call.1} parent=11 // pred_region
          _
        $region20: #{tpu_custom_call.1} parent=11 // pred_fallthru
          _
        // Predicated region
        $region21: #{tpu_custom_call.1} parent=11 // pred_check
          %p174 = pneg %p106
        $region22: #{tpu_custom_call.1} parent=11 // pred_check_branch
          %176 = sbr.rel (%p174) target = $region24
        $region23: #{tpu_custom_call.1} parent=11 // pred_region
          _
        $region24: #{tpu_custom_call.1} parent=11 // pred_fallthru
          _
        // Predicated region
        $region25: #{tpu_custom_call.1} parent=11 // pred_check
          %p177 = pneg %p127
        $region26: #{tpu_custom_call.1} parent=11 // pred_check_branch
          %179 = sbr.rel (%p177) target = $region28
        $region27: #{tpu_custom_call.1} parent=11 // pred_region
          _
        $region28: #{tpu_custom_call.1} parent=11 // pred_fallthru
          _
      $region12: #{tpu_custom_call.1} parent=5 // pred_fallthru
        _
      %p180 = scmp.lt.s32.totalorder %s17, 2
      // Predicated region
      $region29: #{tpu_custom_call.1} parent=5 // pred_check
        %p181 = pneg %p180
      $region30: #{tpu_custom_call.1} parent=5 // pred_check_branch
        %183 = sbr.rel (%p181) target = $region32
      $region31: #{tpu_custom_call.1} parent=5 // pred_region
        // Predicated region
        $region33: #{tpu_custom_call.1} parent=31 // pred_check
          %p184 = pneg %p37
        $region34: #{tpu_custom_call.1} parent=31 // pred_check_branch
          %186 = sbr.rel (%p184) target = $region36
        $region35: #{tpu_custom_call.1} parent=31 // pred_region
          %s187 = sand.u32 %s27, 1
          %s188 = scalar_lea.sflag [#allocation3], %s187
          %s189 = sand.u32 %s27, 1
          %s190 = smul.addr %s189, 8
          %s191 = scalar_lea.vmem [#allocation2], %s190
          %s193 = ssub.s32 128, 128
          %194 = vsyncadd %s188, %s193
          %s195 = smul.addr %s17, 2
          %s196 = smul.addr %s195, 64
          %s197 = scalar_lea.hbm %s0, %s196
          %s199 = sshll.u32 %s191, 4
          %s200 = int_to_ptr.vmem [resolvable:$true] %s199
          %202 = dma.hbm_to_vmem [thread:$0]  %s197, 128, %s200, %s188
        $region36: #{tpu_custom_call.1} parent=31 // pred_fallthru
          _
      $region32: #{tpu_custom_call.1} parent=5 // pred_fallthru
        _
      %p203 = scmp.le.s32.totalorder 1, %s17
      %p204 = scmp.lt.s32.totalorder %s17, 3
      %p205 = pnand %p203, %p204
      %p206 = pneg %p205
      // Predicated region
      $region37: #{tpu_custom_call.1} parent=5 // pred_check
        _
      $region38: #{tpu_custom_call.1} parent=5 // pred_check_branch
        %208 = sbr.rel (%p205) target = $region40
      $region39: #{tpu_custom_call.1} parent=5 // pred_region
        %s209 = ssub.s32 %s17, 1
        %s210 = sand.u32 %s30, 1
        %s211 = scalar_lea.sflag [#allocation3], %s210
        %s212 = sand.u32 %s30, 1
        %s213 = smul.addr %s212, 8
        %s214 = scalar_lea.vmem [#allocation2], %s213
        // Predicated region
        $region41: #{tpu_custom_call.1} parent=39 // pred_check
          %p215 = pneg %p43
        $region42: #{tpu_custom_call.1} parent=39 // pred_check_branch
          %217 = sbr.rel (%p215) target = $region44
        $region43: #{tpu_custom_call.1} parent=39 // pred_region
          %218 = dma.done %s211, 128
        $region44: #{tpu_custom_call.1} parent=39 // pred_fallthru
          _
        %s219 = sand.u32 %s30, 1
        %s220 = scalar_lea.sflag [#allocation3], %s219
        %s221 = sand.u32 %s30, 1
        %s222 = smul.addr %s221, 8
        %s223 = scalar_lea.vmem [#allocation2], %s222
        %p224 = pneg %p43
        %p225 = pneg %p40
        %p226 = pneg %p64
        %p227 = pneg %p61
        %p228 = pneg %p85
        %p229 = pneg %p82
        %p230 = pneg %p106
        %p231 = pneg %p103
        %p232 = pneg %p127
        %p233 = pneg %p124
        %p234 = pneg %p153
        %p235 = pneg %p150
        %s236 = sand.u32 %s140, 1
        %s237 = scalar_lea.sflag [#allocation4], %s236
        %s238 = sand.u32 %s140, 1
        %s239 = smul.addr %s238, 8
        %s240 = scalar_lea.vmem [#allocation5], %s239
        %v241 = vld [vmem:[%s214] sm:$0xff]
        %v242 = vld [vmem:[%s1] sm:$0xf]
        %v243 = vld [vmem:[%s3] sm:$0xf]
        %v244 = vld [vmem:[%s2] sm:$0xf]
        %v245 = vld [vmem:[%s4] sm:$0xf]
        %v246 = vlaneseq
        %v247 = vand.u32 %v246, 127
        %v248 = vadd.s32 %v247, 128
        %vm249 = vcmp.lt.s32.totalorder %v247, 0
        %v250 = vsub.s32 0, %v247
        %v251 = vsel %vm249, %v250, %v247
        %v252 = vshrl.u32 %v251, 4
        %v253 = vand.u32 %v251, 15
        %v254 = vsub.s32 0, %v253
        %v255 = vsel %vm249, %v254, %v253
        %vm256 = vcmp.lt.s32.totalorder %v248, 0
        %v257 = vsub.s32 0, %v248
        %v258 = vsel %vm256, %v257, %v248
        %v259 = vshrl.u32 %v258, 4
        %v260 = vand.u32 %v258, 15
        %v261 = vsub.s32 0, %v260
        %v262 = vsel %vm256, %v261, %v260
        %vm263 = vcmp.ne.s32.totalorder %v255, 0
        %vm264 = vcmp.ne.s32.totalorder %v262, 0
        %vm265 = vcmp.lt.s32.totalorder %v255, 0
        %vm266 = vcmp.lt.s32.totalorder %v262, 0
        %vm267 = vmand %vm265, %vm263
        %vm268 = vmand %vm266, %vm264
        %v269 = vadd.s32 %v255, 16
        %v270 = vadd.s32 %v262, 16
        %v271 = vsel %vm267, %v269, %v255
        %v272 = vsel %vm268, %v270, %v262
        %vm273 = vcmp.ne.s32.totalorder %v271, 0
        %vm274 = vcmp.ne.s32.totalorder %v272, 0
        %vm275 = vcmp.ne.s32.totalorder %v271, 15
        %vm276 = vcmp.ne.s32.totalorder %v272, 15
        %v278 = vcombine.high %v241, %v241
        %279 = vrot.lane.b32.xlu0 %v241, 17
        %v280 = vpop.permute.xlu0 %279
        %281 = vrot.lane.b32.xlu0 %v278, 17
        %v282 = vpop.permute.xlu0 %281
        %vm283 = vcmask 138240
        %v284 = vsel %vm283, %v280, %v282
        %v288 = vsel %vm283, 0.0, %v280
        %v289 = vsel %vm283, %v282, 0.0
        %v290 = vsel %vm273, 1, 0
        %v291 = vsel %vm274, 1, 0
        %vm292 = vcmp.eq.s32.totalorder %v290, 1
        %vm293 = vcmp.eq.s32.totalorder %v291, 1
        %v294 = vsel %vm292, %v288, 0.0
        %v295 = vsel %vm293, %v284, 0.0
        %v296 = vsel %vm275, 1, 0
        %v297 = vsel %vm276, 1, 0
        %vm298 = vcmp.eq.s32.totalorder %v296, 1
        %vm299 = vcmp.eq.s32.totalorder %v297, 1
        %302 = vrot.lane.b32.xlu0 %v288, 126
        %v303 = vpop.permute.xlu0 %302
        %304 = vrot.lane.b32.xlu0 %v284, 126
        %v305 = vpop.permute.xlu0 %304
        %306 = vrot.lane.b32.xlu0 %v289, 126
        %v307 = vpop.permute.xlu0 %306
        %vm308 = vcmask 1031168
        %v309 = vsel %vm308, %v303, %v305
        %v310 = vsel %vm308, %v305, %v307
        %v313 = vsel %vm298, %v309, 0.0
        %v314 = vsel %vm299, %v310, 0.0
        %315 = vrot.lane.b32.xlu0 %v288, 112
        %v316 = vpop.permute.xlu0 %315
        %317 = vrot.lane.b32.xlu0 %v284, 112
        %v318 = vpop.permute.xlu0 %317
        %319 = vrot.lane.b32.xlu0 %v289, 112
        %v320 = vpop.permute.xlu0 %319
        %vm321 = vcmask 916480
        %v322 = vsel %vm321, %v316, %v318
        %v323 = vsel %vm321, %v318, %v320
        %v326 = vsel %vm292, %v322, 0.0
        %v327 = vsel %vm293, %v323, 0.0
        %328 = vrot.lane.b32.xlu0 %v288, 110
        %v329 = vpop.permute.xlu0 %328
        %330 = vrot.lane.b32.xlu0 %v284, 110
        %v331 = vpop.permute.xlu0 %330
        %332 = vrot.lane.b32.xlu0 %v289, 110
        %v333 = vpop.permute.xlu0 %332
        %vm334 = vcmask 900096
        %v335 = vsel %vm334, %v329, %v331
        %v336 = vsel %vm334, %v331, %v333
        %v339 = vsel %vm298, %v335, 0.0
        %v340 = vsel %vm299, %v336, 0.0
        %341 = vrot.lane.b32.xlu0 %v288, 96
        %v342 = vpop.permute.xlu0 %341
        %343 = vrot.lane.b32.xlu0 %v284, 96
        %v344 = vpop.permute.xlu0 %343
        %345 = vrot.lane.b32.xlu0 %v289, 96
        %v346 = vpop.permute.xlu0 %345
        %vm347 = vcmask 785408
        %v348 = vsel %vm347, %v342, %v344
        %v349 = vsel %vm347, %v344, %v346
        %v352 = vsel %vm292, %v348, 0.0
        %v353 = vsel %vm293, %v349, 0.0
        %354 = vrot.lane.b32.xlu0 %v288, 94
        %v355 = vpop.permute.xlu0 %354
        %356 = vrot.lane.b32.xlu0 %v284, 94
        %v357 = vpop.permute.xlu0 %356
        %358 = vrot.lane.b32.xlu0 %v289, 94
        %v359 = vpop.permute.xlu0 %358
        %vm360 = vcmask 769024
        %v361 = vsel %vm360, %v355, %v357
        %v362 = vsel %vm360, %v357, %v359
        %v365 = vsel %vm298, %v361, 0.0
        %v366 = vsel %vm299, %v362, 0.0
        %v367 = vrot.slane %v288, 4
        %v368 = vrot.slane %v284, 4
        %v369 = vrot.slane %v289, 4
        %370 = vrot.lane.b32.xlu0 %v367, 127
        %v371 = vpop.permute.xlu0 %370
        %372 = vrot.lane.b32.xlu0 %v368, 127
        %v373 = vpop.permute.xlu0 %372
        %374 = vrot.lane.b32.xlu0 %v369, 127
        %v375 = vpop.permute.xlu0 %374
        %vm376 = vcmask 1039360
        %v377 = vsel %vm376, %v371, %v373
        %v378 = vsel %vm376, %v373, %v375
        %v383 = vrot.slane %v326, 4
        %v384 = vrot.slane %v327, 4
        %387 = vrot.lane.b32.xlu0 %v288, 111
        %v388 = vpop.permute.xlu0 %387
        %389 = vrot.lane.b32.xlu0 %v284, 111
        %v390 = vpop.permute.xlu0 %389
        %391 = vrot.lane.b32.xlu0 %v289, 111
        %v392 = vpop.permute.xlu0 %391
        %vm393 = vcmask 908288
        %v394 = vsel %vm393, %v388, %v390
        %v395 = vsel %vm393, %v390, %v392
        %v400 = vrot.slane %v339, 4
        %v401 = vrot.slane %v340, 4
        %404 = vrot.lane.b32.xlu0 %v367, 95
        %v405 = vpop.permute.xlu0 %404
        %406 = vrot.lane.b32.xlu0 %v368, 95
        %v407 = vpop.permute.xlu0 %406
        %408 = vrot.lane.b32.xlu0 %v369, 95
        %v409 = vpop.permute.xlu0 %408
        %vm410 = vcmask 777216
        %v411 = vsel %vm410, %v405, %v407
        %v412 = vsel %vm410, %v407, %v409
        %vm415 = vcmask 1043456
        %v416 = vsel %vm415, %v294, %v377
        %v417 = vsel %vm415, %v295, %v378
        %v418 = vsel %vm415, %v313, %v383
        %v419 = vsel %vm415, %v314, %v384
        %v420 = vsel %vm415, %v394, %v400
        %v421 = vsel %vm415, %v395, %v401
        %v422 = vsel %vm415, %v352, %v411
        %v423 = vsel %vm415, %v353, %v412
        %425 = vset.pattern.permute.xlu0 0
        %426 = vperm.xlu0 %425, %v244
        %v427 = vpop.permute.xlu0 %426
        %vm429 = vcmask 293888
        %v431 = vsel %vm429, %v242, 0
        %v434 = vsel %vm415, %v365, 0
        %v437 = vsel %vm415, %v366, 0
        %439 = vmatprep.subr.mxu0 %v417
        %440 = vmatpush1.msra.mxu0 %v416
        %441 = vmatprep.subr.mxu0 %v419
        %442 = vmatpush1.msra.mxu0 %v418
        %443 = vmatprep.subr.mxu0 %v421
        %444 = vmatpush1.msra.mxu0 %v420
        %445 = vmatprep.subr.mxu0 %v423
        %446 = vmatpush1.msra.mxu0 %v422
        %447 = vmatprep.subr.mxu0 %v437
        %448 = vmatpush1.msra.mxu0 %v434
        %449 = vmatprep.subr.mxu0 0.0
        %450 = vmatpush1.msra.mxu0 0.0
        %451 = vmatprep.subr.mxu0 0.0
        %452 = vmatpush1.msra.mxu0 0.0
        %453 = vmatprep.subr.mxu0 0.0
        %454 = vmatpush1.msra.mxu0 0.0
        %455 = vmatprep.subr.mxu0 0.0
        %456 = vmatpush1.msra.mxu0 0.0
        %457 = vmatprep.subr.mxu0 0.0
        %458 = vmatpush1.msra.mxu0 0.0
        %459 = vmatprep.subr.mxu0 0.0
        %460 = vmatpush1.msra.mxu0 0.0
        %461 = vmatprep.subr.mxu0 0.0
        %462 = vmatpush1.msra.mxu0 0.0
        %463 = vmatprep.subr.mxu0 0.0
        %464 = vmatpush1.msra.mxu0 0.0
        %465 = vmatprep.subr.mxu0 0.0
        %466 = vmatpush1.msra.mxu0 0.0
        %467 = vmatprep.subr.mxu0 0.0
        %468 = vmatpush1.msra.mxu0 0.0
        %469 = vmatprep.subr.mxu0 0.0
        %470 = vmatpush1.msra.mxu0 0.0
        %471 = vmatprep.subr.mxu0 0.0
        %472 = vmatpush1.msra.mxu0 0.0
        %473 = vmatprep.subr.mxu0 0.0
        %474 = vmatpush1.msra.mxu0 0.0
        %475 = vmatprep.subr.mxu0 0.0
        %476 = vmatpush1.msra.mxu0 0.0
        %477 = vmatprep.subr.mxu0 0.0
        %478 = vmatpush1.msra.mxu0 0.0
        %479 = vmatprep.subr.mxu0 0.0
        %480 = vmatpush1.msra.mxu0 0.0
        %481 = vmatprep.subr.mxu0 0.0
        %482 = vmatpush1.msra.mxu0 0.0
        %483 = vmatprep.subr.mxu0 0.0
        %484 = vmatpush1.msra.mxu0 0.0
        %485 = vmatprep.subr.mxu0 0.0
        %486 = vmatpush1.msra.mxu0 0.0
        %487 = vmatprep.subr.mxu0 0.0
        %488 = vmatpush1.msra.mxu0 0.0
        %489 = vmatprep.subr.mxu0 0.0
        %490 = vmatpush1.msra.mxu0 0.0
        %491 = vmatprep.subr.mxu0 0.0
        %492 = vmatpush1.msra.mxu0 0.0
        %493 = vmatprep.subr.mxu0 0.0
        %494 = vmatpush1.msra.mxu0 0.0
        %495 = vmatprep.subr.mxu0 0.0
        %496 = vmatpush1.msra.mxu0 0.0
        %497 = vmatprep.subr.mxu0 0.0
        %498 = vmatpush1.msra.mxu0 0.0
        %499 = vmatprep.subr.mxu0 0.0
        %500 = vmatpush1.msra.mxu0 0.0
        %501 = vmatprep.subr.mxu0 0.0
        %502 = vmatpush1.msra.mxu0 0.0
        %503 = vmatprep.mubr.f32.mxu0 0.0
        %504 = vmatmul.mubr.f32.gmra.mrb[0].mxu0 %v431
        %v505 = vpop.f32.mrb[0].mxu0
        %v506 = vadd.f32 %v427, %v505
        %v507 = vpop.f32.mrb[0].mxu0
        %v508 = vadd.f32 %v427, %v507
        %509 = vdwg.mxu0
        %v510 = vmax.f32 %v506, 0.0
        %v511 = vmax.f32 %v508, 0.0
        %514 = vrot.lane.b32.xlu0 %v510, 17
        %v515 = vpop.permute.xlu0 %514
        %516 = vrot.lane.b32.xlu0 %v511, 17
        %v517 = vpop.permute.xlu0 %516
        %v518 = vsel %vm283, %v515, %v517
        %v522 = vsel %vm283, 0.0, %v515
        %v523 = vsel %vm283, %v517, 0.0
        %v524 = vsel %vm292, %v522, 0.0
        %v525 = vsel %vm293, %v518, 0.0
        %528 = vrot.lane.b32.xlu0 %v522, 126
        %v529 = vpop.permute.xlu0 %528
        %530 = vrot.lane.b32.xlu0 %v518, 126
        %v531 = vpop.permute.xlu0 %530
        %532 = vrot.lane.b32.xlu0 %v523, 126
        %v533 = vpop.permute.xlu0 %532
        %v534 = vsel %vm308, %v529, %v531
        %v535 = vsel %vm308, %v531, %v533
        %v538 = vsel %vm298, %v534, 0.0
        %v539 = vsel %vm299, %v535, 0.0
        %540 = vrot.lane.b32.xlu0 %v522, 112
        %v541 = vpop.permute.xlu0 %540
        %542 = vrot.lane.b32.xlu0 %v518, 112
        %v543 = vpop.permute.xlu0 %542
        %544 = vrot.lane.b32.xlu0 %v523, 112
        %v545 = vpop.permute.xlu0 %544
        %v546 = vsel %vm321, %v541, %v543
        %v547 = vsel %vm321, %v543, %v545
        %v550 = vsel %vm292, %v546, 0.0
        %v551 = vsel %vm293, %v547, 0.0
        %552 = vrot.lane.b32.xlu0 %v522, 110
        %v553 = vpop.permute.xlu0 %552
        %554 = vrot.lane.b32.xlu0 %v518, 110
        %v555 = vpop.permute.xlu0 %554
        %556 = vrot.lane.b32.xlu0 %v523, 110
        %v557 = vpop.permute.xlu0 %556
        %v558 = vsel %vm334, %v553, %v555
        %v559 = vsel %vm334, %v555, %v557
        %v562 = vsel %vm298, %v558, 0.0
        %v563 = vsel %vm299, %v559, 0.0
        %564 = vrot.lane.b32.xlu0 %v522, 96
        %v565 = vpop.permute.xlu0 %564
        %566 = vrot.lane.b32.xlu0 %v518, 96
        %v567 = vpop.permute.xlu0 %566
        %568 = vrot.lane.b32.xlu0 %v523, 96
        %v569 = vpop.permute.xlu0 %568
        %v570 = vsel %vm347, %v565, %v567
        %v571 = vsel %vm347, %v567, %v569
        %v574 = vsel %vm292, %v570, 0.0
        %v575 = vsel %vm293, %v571, 0.0
        %576 = vrot.lane.b32.xlu0 %v522, 94
        %v577 = vpop.permute.xlu0 %576
        %578 = vrot.lane.b32.xlu0 %v518, 94
        %v579 = vpop.permute.xlu0 %578
        %580 = vrot.lane.b32.xlu0 %v523, 94
        %v581 = vpop.permute.xlu0 %580
        %v582 = vsel %vm360, %v577, %v579
        %v583 = vsel %vm360, %v579, %v581
        %v586 = vsel %vm298, %v582, 0.0
        %v587 = vsel %vm299, %v583, 0.0
        %v588 = vrot.slane %v522, 4
        %v589 = vrot.slane %v518, 4
        %v590 = vrot.slane %v523, 4
        %591 = vrot.lane.b32.xlu0 %v588, 127
        %v592 = vpop.permute.xlu0 %591
        %593 = vrot.lane.b32.xlu0 %v589, 127
        %v594 = vpop.permute.xlu0 %593
        %595 = vrot.lane.b32.xlu0 %v590, 127
        %v596 = vpop.permute.xlu0 %595
        %v597 = vsel %vm376, %v592, %v594
        %v598 = vsel %vm376, %v594, %v596
        %v603 = vrot.slane %v550, 4
        %v604 = vrot.slane %v551, 4
        %607 = vrot.lane.b32.xlu0 %v522, 111
        %v608 = vpop.permute.xlu0 %607
        %609 = vrot.lane.b32.xlu0 %v518, 111
        %v610 = vpop.permute.xlu0 %609
        %611 = vrot.lane.b32.xlu0 %v523, 111
        %v612 = vpop.permute.xlu0 %611
        %v613 = vsel %vm393, %v608, %v610
        %v614 = vsel %vm393, %v610, %v612
        %v619 = vrot.slane %v562, 4
        %v620 = vrot.slane %v563, 4
        %623 = vrot.lane.b32.xlu0 %v588, 95
        %v624 = vpop.permute.xlu0 %623
        %625 = vrot.lane.b32.xlu0 %v589, 95
        %v626 = vpop.permute.xlu0 %625
        %627 = vrot.lane.b32.xlu0 %v590, 95
        %v628 = vpop.permute.xlu0 %627
        %v629 = vsel %vm410, %v624, %v626
        %v630 = vsel %vm410, %v626, %v628
        %v633 = vsel %vm415, %v524, %v597
        %v634 = vsel %vm415, %v525, %v598
        %v635 = vsel %vm415, %v538, %v603
        %v636 = vsel %vm415, %v539, %v604
        %v637 = vsel %vm415, %v613, %v619
        %v638 = vsel %vm415, %v614, %v620
        %v639 = vsel %vm415, %v574, %v629
        %v640 = vsel %vm415, %v575, %v630
        %642 = vset.pattern.permute.xlu0 0
        %643 = vperm.xlu0 %642, %v245
        %v644 = vpop.permute.xlu0 %643
        %v647 = vsel %vm429, %v243, 0
        %v650 = vsel %vm415, %v586, 0
        %v653 = vsel %vm415, %v587, 0
        %655 = vmatprep.subr.mxu0 %v634
        %656 = vmatpush1.msra.mxu0 %v633
        %657 = vmatprep.subr.mxu0 %v636
        %658 = vmatpush1.msra.mxu0 %v635
        %659 = vmatprep.subr.mxu0 %v638
        %660 = vmatpush1.msra.mxu0 %v637
        %661 = vmatprep.subr.mxu0 %v640
        %662 = vmatpush1.msra.mxu0 %v639
        %663 = vmatprep.subr.mxu0 %v653
        %664 = vmatpush1.msra.mxu0 %v650
        %665 = vmatprep.subr.mxu0 0.0
        %666 = vmatpush1.msra.mxu0 0.0
        %667 = vmatprep.subr.mxu0 0.0
        %668 = vmatpush1.msra.mxu0 0.0
        %669 = vmatprep.subr.mxu0 0.0
        %670 = vmatpush1.msra.mxu0 0.0
        %671 = vmatprep.subr.mxu0 0.0
        %672 = vmatpush1.msra.mxu0 0.0
        %673 = vmatprep.subr.mxu0 0.0
        %674 = vmatpush1.msra.mxu0 0.0
        %675 = vmatprep.subr.mxu0 0.0
        %676 = vmatpush1.msra.mxu0 0.0
        %677 = vmatprep.subr.mxu0 0.0
        %678 = vmatpush1.msra.mxu0 0.0
        %679 = vmatprep.subr.mxu0 0.0
        %680 = vmatpush1.msra.mxu0 0.0
        %681 = vmatprep.subr.mxu0 0.0
        %682 = vmatpush1.msra.mxu0 0.0
        %683 = vmatprep.subr.mxu0 0.0
        %684 = vmatpush1.msra.mxu0 0.0
        %685 = vmatprep.subr.mxu0 0.0
        %686 = vmatpush1.msra.mxu0 0.0
        %687 = vmatprep.subr.mxu0 0.0
        %688 = vmatpush1.msra.mxu0 0.0
        %689 = vmatprep.subr.mxu0 0.0
        %690 = vmatpush1.msra.mxu0 0.0
        %691 = vmatprep.subr.mxu0 0.0
        %692 = vmatpush1.msra.mxu0 0.0
        %693 = vmatprep.subr.mxu0 0.0
        %694 = vmatpush1.msra.mxu0 0.0
        %695 = vmatprep.subr.mxu0 0.0
        %696 = vmatpush1.msra.mxu0 0.0
        %697 = vmatprep.subr.mxu0 0.0
        %698 = vmatpush1.msra.mxu0 0.0
        %699 = vmatprep.subr.mxu0 0.0
        %700 = vmatpush1.msra.mxu0 0.0
        %701 = vmatprep.subr.mxu0 0.0
        %702 = vmatpush1.msra.mxu0 0.0
        %703 = vmatprep.subr.mxu0 0.0
        %704 = vmatpush1.msra.mxu0 0.0
        %705 = vmatprep.subr.mxu0 0.0
        %706 = vmatpush1.msra.mxu0 0.0
        %707 = vmatprep.subr.mxu0 0.0
        %708 = vmatpush1.msra.mxu0 0.0
        %709 = vmatprep.subr.mxu0 0.0
        %710 = vmatpush1.msra.mxu0 0.0
        %711 = vmatprep.subr.mxu0 0.0
        %712 = vmatpush1.msra.mxu0 0.0
        %713 = vmatprep.subr.mxu0 0.0
        %714 = vmatpush1.msra.mxu0 0.0
        %715 = vmatprep.subr.mxu0 0.0
        %716 = vmatpush1.msra.mxu0 0.0
        %717 = vmatprep.subr.mxu0 0.0
        %718 = vmatpush1.msra.mxu0 0.0
        %719 = vmatprep.mubr.f32.mxu0 0.0
        %720 = vmatmul.mubr.f32.gmra.mrb[0].mxu0 %v647
        %v721 = vpop.f32.mrb[0].mxu0
        %v722 = vadd.f32 %v644, %v721
        %v723 = vpop.f32.mrb[0].mxu0
        %v724 = vadd.f32 %v644, %v723
        %725 = vdwg.mxu0
        %v727 = vadd.f32 %v722, %v241
        %v728 = vadd.f32 %v724, %v278
        %v729 = vmax.f32 %v727, 0.0
        %v730 = vmax.f32 %v728, 0.0
        %v733 = vcombine.low %v729, %v730
        %735 = vst [vmem:[%s240] sm:$0xff] %v733
        %s736 = sand.u32 %s140, 1
        %s737 = scalar_lea.sflag [#allocation4], %s736
        %s738 = sand.u32 %s140, 1
        %s739 = smul.addr %s738, 8
        %s740 = scalar_lea.vmem [#allocation5], %s739
        // Predicated region
        $region45: #{tpu_custom_call.1} parent=39 // pred_check
          %p741 = pneg %p150
        $region46: #{tpu_custom_call.1} parent=39 // pred_check_branch
          %743 = sbr.rel (%p741) target = $region48
        $region47: #{tpu_custom_call.1} parent=39 // pred_region
          %s745 = ssub.s32 128, 128
          %746 = vsyncadd %s737, %s745
          %s747 = smul.addr %s22, 2
          %s748 = smul.addr %s747, 64
          %s749 = scalar_lea.hbm %s5, %s748
          %s751 = sshll.u32 %s740, 4
          %s752 = int_to_ptr.vmem [resolvable:$true] %s751
          %754 = dma.vmem_to_hbm [thread:$0]  %s752, 128, %s749, %s737
        $region48: #{tpu_custom_call.1} parent=39 // pred_fallthru
          _
      $region40: #{tpu_custom_call.1} parent=5 // pred_fallthru
        _
      %p755 = scmp.le.s32.totalorder 2, %s17
      // Predicated region
      $region49: #{tpu_custom_call.1} parent=5 // pred_check
        %p756 = pneg %p755
      $region50: #{tpu_custom_call.1} parent=5 // pred_check_branch
        %758 = sbr.rel (%p756) target = $region52
      $region51: #{tpu_custom_call.1} parent=5 // pred_region
        %s759 = ssub.s32 %s17, 2
        // Predicated region
        $region53: #{tpu_custom_call.1} parent=51 // pred_check
          %p760 = pneg %p156
        $region54: #{tpu_custom_call.1} parent=51 // pred_check_branch
          %762 = sbr.rel (%p760) target = $region56
        $region55: #{tpu_custom_call.1} parent=51 // pred_region
          %s763 = sand.u32 %s141, 1
          %s764 = scalar_lea.sflag [#allocation4], %s763
          %s765 = sand.u32 %s141, 1
          %s766 = smul.addr %s765, 8
          %s767 = scalar_lea.vmem [#allocation5], %s766
          %768 = dma.done %s764, 128
        $region56: #{tpu_custom_call.1} parent=51 // pred_fallthru
          _
      $region52: #{tpu_custom_call.1} parent=5 // pred_fallthru
        _
    $region6: #{tpu_custom_call.1} parent=1 // loop_footer
      %s21 = sadd.s32 1, %s17
    $region7: #{tpu_custom_call.1} parent=1 // loop_footer_branch
      %16 = sbr.rel target = $region3
    $region8: #{tpu_custom_call.1} parent=1 // loop_exit
      _
    %769 = vsyncpa [#allocation3], 1
    %s770 = scalar_lea.sflag [#allocation3], 1
    %771 = vsyncpa %s770, 1
    %772 = vsyncpa [#allocation4], 1
    %s773 = scalar_lea.sflag [#allocation4], 1
    %774 = vsyncpa %s773, 1

</llo_original>
